<compile_context>
chip_gen: v5e
topology: v5e:2x2
jax: 0.10.0
libtpu: 0.0.40
codegen_flags: <defaults>
</compile_context>

<pallas_src>
import functools

import jax
import jax.numpy as jnp
import numpy as np
from jax import lax
from jax.experimental import pallas as pl
from jax.experimental.pallas import tpu as pltpu


_VMEM_LIMIT = 32 * 1024 * 1024      # safe scoped-VMEM ask on v5e / v6e / v7x
_VMEM_HEADROOM = 2 * 1024 * 1024    # internal scratch / semaphores


def _round_up(x, m):
    return ((x + m - 1) // m) * m


def _choose_tile_sizes(bsz, ds, dt, item_s, item_t, max_tk):
    """Largest D tiles that keep (2 inputs x 2 pipeline buffers) + the two
    double-buffered (B,B) f32 output accumulators within the VMEM budget."""
    rows = max(8, _round_up(bsz, 8))                       # sublane padding
    out_bytes = 2 * 2 * rows * _round_up(bsz, 128) * 4     # 2 outs, 2 buffers
    budget = _VMEM_LIMIT - _VMEM_HEADROOM - out_bytes
    budget = max(budget, 4 * 1024 * 1024)
    per_input = budget // 2
    max_tk = max(128, (max_tk // 128) * 128)

    def pick(d, item):
        cap = per_input // (2 * rows * item)               # 2 pipeline buffers
        cap = max(128, (cap // 128) * 128)
        cap = min(cap, max_tk)
        if d <= cap:
            return d                                       # whole-D, one tile
        return cap                                         # ragged tail masked

    return pick(ds, item_s), pick(dt, item_t)


def _make_gram_kernel(bsz, tk_s, tk_t, ds, dt, n_ks, n_kt, n_k_half):
    mask_s = (ds % tk_s) != 0
    mask_t = (dt % tk_t) != 0

    def _prep(x):
        # bf16 feeds the MXU natively (f32 accumulation); everything else f32.
        if x.dtype in (jnp.bfloat16, jnp.float32):
            return x
        return x.astype(jnp.float32)

    def kernel(fs_ref, ft_ref, gs_ref, gt_ref):
        h = pl.program_id(0)
        k = pl.program_id(1)
        kk = h * n_k_half + k                 # global D-tile index

        @pl.when(k == 0)
        def _init():
            gs_ref[...] = jnp.zeros_like(gs_ref)
            gt_ref[...] = jnp.zeros_like(gt_ref)

        @pl.when(kk < n_ks)
        def _acc_s():
            fs = _prep(fs_ref[...])
            if mask_s:  # zero garbage columns of the (possibly) ragged tile
                col = lax.broadcasted_iota(jnp.int32, (bsz, tk_s), 1) + kk * tk_s
                fs = jnp.where(col < ds, fs, 0.0)
            g = lax.dot_general(fs, fs, (((1,), (1,)), ((), ())),
                                preferred_element_type=jnp.float32)
            gs_ref[...] += g[None, :, :]

        @pl.when(kk < n_kt)
        def _acc_t():
            ft = _prep(ft_ref[...])
            if mask_t:
                col = lax.broadcasted_iota(jnp.int32, (bsz, tk_t), 1) + kk * tk_t
                ft = jnp.where(col < dt, ft, 0.0)
            g = lax.dot_general(ft, ft, (((1,), (1,)), ((), ())),
                                preferred_element_type=jnp.float32)
            gt_ref[...] += g[None, :, :]

    return kernel


@functools.partial(jax.jit, static_argnames=("max_tk",))
def pkt_loss(f_s, f_t, *, max_tk=1 << 20, eps=1e-7):
    """Mirrors PKTLoss.forward(f_s, f_t).  Accepts (B, D) or (B, C, H, W)."""
    bsz = f_s.shape[0]
    assert f_t.shape[0] == bsz, "student/teacher batch sizes must match"

    # Flatten only (reshape is free for contiguous arrays); keep native dtype
    # in HBM — bf16 streams half the bytes and is fed to the MXU natively.
    fs = f_s.reshape(bsz, -1)
    ft = f_t.reshape(bsz, -1)
    ds, dt = fs.shape[1], ft.shape[1]

    tk_s, tk_t = _choose_tile_sizes(bsz, ds, dt, fs.dtype.itemsize,
                                    ft.dtype.itemsize, max_tk)
    n_ks = -(-ds // tk_s)
    n_kt = -(-dt // tk_t)
    n_k = max(n_ks, n_kt)
    n_split = 2 if n_k >= 2 else 1            # 2 partial Grams -> both v7x TCs
    n_k_half = -(-n_k // n_split)

    kernel = _make_gram_kernel(bsz, tk_s, tk_t, ds, dt, n_ks, n_kt, n_k_half)

    def fs_map(h, k):
        return (0, jnp.minimum(h * n_k_half + k, n_ks - 1))

    def ft_map(h, k):
        return (0, jnp.minimum(h * n_k_half + k, n_kt - 1))

    gs_part, gt_part = pl.pallas_call(
        kernel,
        out_shape=(
            jax.ShapeDtypeStruct((n_split, bsz, bsz), jnp.float32),
            jax.ShapeDtypeStruct((n_split, bsz, bsz), jnp.float32),
        ),
        grid_spec=pltpu.PrefetchScalarGridSpec(
            num_scalar_prefetch=0,
            grid=(n_split, n_k_half),
            in_specs=[
                pl.BlockSpec((bsz, tk_s), fs_map),
                pl.BlockSpec((bsz, tk_t), ft_map),
            ],
            out_specs=[
                pl.BlockSpec((1, bsz, bsz), lambda h, k: (h, 0, 0)),
                pl.BlockSpec((1, bsz, bsz), lambda h, k: (h, 0, 0)),
            ],
        ),
        compiler_params=pltpu.CompilerParams(
            dimension_semantics=("parallel", "arbitrary"),
            vmem_limit_bytes=_VMEM_LIMIT,
        ),
    )(fs, ft)

    gs = jnp.sum(gs_part, axis=0)             # (B, B) un-normalized Grams
    gt = jnp.sum(gt_part, axis=0)

    # --- tiny O(B^2) epilogue: exact PKT math on the Gram matrices ---------
    # G_ii = ||f_i||^2, so cosine similarity = G_ij / ((||f_i||+eps)(||f_j||+eps)).
    inv_s = 1.0 / (jnp.sqrt(jnp.diagonal(gs)) + eps)
    inv_t = 1.0 / (jnp.sqrt(jnp.diagonal(gt)) + eps)
    # TODO(synk): torch's post-normalization NaN scrub (x[x != x] = 0) has no
    # Gram-domain equivalent; for finite inputs the two formulations agree.
    sim_s = gs * inv_s[:, None] * inv_s[None, :]
    sim_t = gt * inv_t[:, None] * inv_t[None, :]
    sim_s = (sim_s + 1.0) / 2.0
    sim_t = (sim_t + 1.0) / 2.0
    sim_s = sim_s / jnp.sum(sim_s, axis=1, keepdims=True)
    sim_t = sim_t / jnp.sum(sim_t, axis=1, keepdims=True)
    return jnp.mean(sim_t * jnp.log((sim_t + eps) / (sim_s + eps)))


def _reference_pkt(f_s, f_t, eps=1e-7):
    """Numpy transcription of PKTLoss.cosine_similarity_loss."""
    fs = np.asarray(f_s).astype(np.float64).reshape(f_s.shape[0], -1)
    ft = np.asarray(f_t).astype(np.float64).reshape(f_t.shape[0], -1)

    def normalize(x):
        n = np.sqrt((x ** 2).sum(axis=1, keepdims=True))
        x = x / (n + eps)
        x[np.isnan(x)] = 0.0
        return x

    fs, ft = normalize(fs), normalize(ft)
    ps = fs @ fs.T
    pt = ft @ ft.T
    ps = (ps + 1.0) / 2.0
    pt = (pt + 1.0) / 2.0
    ps = ps / ps.sum(axis=1, keepdims=True)
    pt = pt / pt.sum(axis=1, keepdims=True)
    return float(np.mean(pt * np.log((pt + eps) / (ps + eps))))


if __name__ == "__main__":
    key = jax.random.PRNGKey(0)
    k1, k2, k3, k4, k5, k6, k7, k8 = jax.random.split(key, 8)

    # (a) plain 2-D embeddings (the canonical PKT use case), equal dims.
    fa_s = jax.random.normal(k1, (2, 32), dtype=jnp.float32)
    fa_t = jax.random.normal(k2, (2, 32), dtype=jnp.float32)

    # (b) NCHW feature maps with different C*H*W (flattened in the wrapper).
    fb_s = jax.random.normal(k3, (2, 4, 16, 16), dtype=jnp.float32)
    fb_t = jax.random.normal(k4, (2, 8, 8, 8), dtype=jnp.float32)

    # (c) multi-tile / ragged path: small max_tk forces several 128-wide D
    #     tiles with masked tails, unequal per-input tile counts and the
    #     two-way partial-Gram split.
    fc_s = jax.random.normal(k5, (2, 1000), dtype=jnp.float32)
    fc_t = jax.random.normal(k6, (2, 520), dtype=jnp.float32)

    # (d) bf16 inputs: native-bf16 MXU path with f32 accumulation.
    fd_s = jax.random.normal(k7, (2, 384), dtype=jnp.bfloat16)
    fd_t = jax.random.normal(k8, (2, 384), dtype=jnp.bfloat16)

    cases = [
        (fa_s, fa_t, {}, 1e-4),
        (fb_s, fb_t, {}, 1e-4),
        (fc_s, fc_t, {"max_tk": 256}, 1e-4),
        (fd_s, fd_t, {}, 1e-3),
    ]
    for f_s, f_t, kw, rtol in cases:
        got = jax.block_until_ready(pkt_loss(f_s, f_t, **kw))
        ref = _reference_pkt(f_s, f_t)
        np.testing.assert_allclose(np.asarray(got), ref, rtol=rtol, atol=1e-6)

    print("KERNEL_OK")
</pallas_src>

<mosaic_0001>
module attributes {stable_mosaic.version = 11 : i64} {
  func.func @kernel(%arg0: i32, %arg1: i32, %arg2: memref<2x32xf32, #tpu.memory_space<vmem>>, %arg3: memref<2x32xf32, #tpu.memory_space<vmem>>, %arg4: memref<1x2x2xf32, #tpu.memory_space<vmem>>, %arg5: memref<1x2x2xf32, #tpu.memory_space<vmem>>) attributes {dimension_semantics = [#tpu.dimension_semantics<parallel>, #tpu.dimension_semantics<arbitrary>], iteration_bounds = array<i64: 1, 1>, scalar_prefetch = 0 : i64, scratch_operands = 0 : i64, tpu.core_type = #tpu.core_type<tc>, window_params = [{transform_indices = @transform_0, window_bounds = array<i64: 2, 32>}, {transform_indices = @transform_1, window_bounds = array<i64: 2, 32>}, {transform_indices = @transform_2, window_bounds = array<i64: 1, 2, 2>}, {transform_indices = @transform_3, window_bounds = array<i64: 1, 2, 2>}]} {
    %c1_i32 = arith.constant 1 : i32
    %0 = arith.muli %arg0, %c1_i32 : i32
    %1 = arith.addi %0, %arg1 : i32
    %c0_i32 = arith.constant 0 : i32
    %2 = arith.cmpi eq, %arg1, %c0_i32 : i32
    %3 = arith.extui %2 : i1 to i32
    %c0_i32_0 = arith.constant 0 : i32
    %4 = arith.cmpi ne, %3, %c0_i32_0 : i32
    scf.if %4 {
      %cst = arith.constant 0.000000e+00 : f32
      %11 = vector.broadcast %cst : f32 to vector<1x2x2xf32>
      %c0 = arith.constant 0 : index
      %c0_5 = arith.constant 0 : index
      %c0_6 = arith.constant 0 : index
      %12 = vector.load %arg4[%c0, %c0_5, %c0_6] : memref<1x2x2xf32, #tpu.memory_space<vmem>>, vector<1x2x2xf32>
      tpu.vector_store %arg4[%c0, %c0_5, %c0_6], %11 {strides = array<i32>} : memref<1x2x2xf32, #tpu.memory_space<vmem>>, vector<1x2x2xf32>,
      %cst_7 = arith.constant 0.000000e+00 : f32
      %13 = vector.broadcast %cst_7 : f32 to vector<1x2x2xf32>
      %c0_8 = arith.constant 0 : index
      %c0_9 = arith.constant 0 : index
      %c0_10 = arith.constant 0 : index
      %14 = vector.load %arg5[%c0_8, %c0_9, %c0_10] : memref<1x2x2xf32, #tpu.memory_space<vmem>>, vector<1x2x2xf32>
      tpu.vector_store %arg5[%c0_8, %c0_9, %c0_10], %13 {strides = array<i32>} : memref<1x2x2xf32, #tpu.memory_space<vmem>>, vector<1x2x2xf32>,
    } else {
    }
    %c1_i32_1 = arith.constant 1 : i32
    %5 = arith.cmpi slt, %1, %c1_i32_1 : i32
    %6 = arith.extui %5 : i1 to i32
    %c0_i32_2 = arith.constant 0 : i32
    %7 = arith.cmpi ne, %6, %c0_i32_2 : i32
    scf.if %7 {
      %c0 = arith.constant 0 : index
      %c0_5 = arith.constant 0 : index
      %11 = vector.load %arg2[%c0, %c0_5] : memref<2x32xf32, #tpu.memory_space<vmem>>, vector<2x32xf32>
      %cst = arith.constant dense<0.000000e+00> : vector<2x2xf32>
      %12 = tpu.matmul %11, %11, %cst {dimension_numbers = #tpu.dot_dimension_numbers<[1], [1], [0], [0], [0, 0, 1, 0], [], []>} : vector<2x32xf32>, vector<2x32xf32>, vector<2x2xf32> -> vector<2x2xf32>
      %c0_6 = arith.constant 0 : index
      %c0_7 = arith.constant 0 : index
      %c0_8 = arith.constant 0 : index
      %13 = vector.load %arg4[%c0_6, %c0_7, %c0_8] : memref<1x2x2xf32, #tpu.memory_space<vmem>>, vector<1x2x2xf32>
      %14 = vector.shape_cast %12 : vector<2x2xf32> to vector<1x2x2xf32>
      %15 = arith.addf %13, %14 : vector<1x2x2xf32>
      %c0_9 = arith.constant 0 : index
      %c0_10 = arith.constant 0 : index
      %c0_11 = arith.constant 0 : index
      %16 = vector.load %arg4[%c0_9, %c0_10, %c0_11] : memref<1x2x2xf32, #tpu.memory_space<vmem>>, vector<1x2x2xf32>
      tpu.vector_store %arg4[%c0_9, %c0_10, %c0_11], %15 {strides = array<i32>} : memref<1x2x2xf32, #tpu.memory_space<vmem>>, vector<1x2x2xf32>,
    } else {
    }
    %c1_i32_3 = arith.constant 1 : i32
    %8 = arith.cmpi slt, %1, %c1_i32_3 : i32
    %9 = arith.extui %8 : i1 to i32
    %c0_i32_4 = arith.constant 0 : i32
    %10 = arith.cmpi ne, %9, %c0_i32_4 : i32
    scf.if %10 {
      %c0 = arith.constant 0 : index
      %c0_5 = arith.constant 0 : index
      %11 = vector.load %arg3[%c0, %c0_5] : memref<2x32xf32, #tpu.memory_space<vmem>>, vector<2x32xf32>
      %cst = arith.constant dense<0.000000e+00> : vector<2x2xf32>
      %12 = tpu.matmul %11, %11, %cst {dimension_numbers = #tpu.dot_dimension_numbers<[1], [1], [0], [0], [0, 0, 1, 0], [], []>} : vector<2x32xf32>, vector<2x32xf32>, vector<2x2xf32> -> vector<2x2xf32>
      %c0_6 = arith.constant 0 : index
      %c0_7 = arith.constant 0 : index
      %c0_8 = arith.constant 0 : index
      %13 = vector.load %arg5[%c0_6, %c0_7, %c0_8] : memref<1x2x2xf32, #tpu.memory_space<vmem>>, vector<1x2x2xf32>
      %14 = vector.shape_cast %12 : vector<2x2xf32> to vector<1x2x2xf32>
      %15 = arith.addf %13, %14 : vector<1x2x2xf32>
      %c0_9 = arith.constant 0 : index
      %c0_10 = arith.constant 0 : index
      %c0_11 = arith.constant 0 : index
      %16 = vector.load %arg5[%c0_9, %c0_10, %c0_11] : memref<1x2x2xf32, #tpu.memory_space<vmem>>, vector<1x2x2xf32>
      tpu.vector_store %arg5[%c0_9, %c0_10, %c0_11], %15 {strides = array<i32>} : memref<1x2x2xf32, #tpu.memory_space<vmem>>, vector<1x2x2xf32>,
    } else {
    }
    return
  }
  func.func @transform_0(%arg0: i32, %arg1: i32) -> (i32, i32) {
    %c1_i32 = arith.constant 1 : i32
    %0 = arith.muli %arg0, %c1_i32 : i32
    %1 = arith.addi %0, %arg1 : i32
    %c0_i32 = arith.constant 0 : i32
    %2 = arith.minsi %1, %c0_i32 : i32
    %c0_i32_0 = arith.constant 0 : i32
    %c0_i32_1 = arith.constant 0 : i32
    return %c0_i32_0, %2 : i32, i32
  }
  func.func @transform_1(%arg0: i32, %arg1: i32) -> (i32, i32) {
    %c1_i32 = arith.constant 1 : i32
    %0 = arith.muli %arg0, %c1_i32 : i32
    %1 = arith.addi %0, %arg1 : i32
    %c0_i32 = arith.constant 0 : i32
    %2 = arith.minsi %1, %c0_i32 : i32
    %c0_i32_0 = arith.constant 0 : i32
    %c0_i32_1 = arith.constant 0 : i32
    return %c0_i32_0, %2 : i32, i32
  }
  func.func @transform_2(%arg0: i32, %arg1: i32) -> (i32, i32, i32) {
    %c0_i32 = arith.constant 0 : i32
    %c0_i32_0 = arith.constant 0 : i32
    %c0_i32_1 = arith.constant 0 : i32
    return %arg0, %c0_i32, %c0_i32_0 : i32, i32, i32
  }
  func.func @transform_3(%arg0: i32, %arg1: i32) -> (i32, i32, i32) {
    %c0_i32 = arith.constant 0 : i32
    %c0_i32_0 = arith.constant 0 : i32
    %c0_i32_1 = arith.constant 0 : i32
    return %arg0, %c0_i32, %c0_i32_0 : i32, i32, i32
  }
}

</mosaic_0001>

<llo_original>
// kernel: pkt_loss.1
$region0: #{pkt_loss.1}
  #allocation0 [shape = 'u32[]', space=smem, size = 0x4, offset = 0x4, fixed_abs, tag = 'smem constant byte address 0x4 - core index']
  #allocation1 [shape = 'u32[72,128]{1,0:T(1,128)}', space=vmem, size = 0x9000, scoped, tag = 'internal scratch']
  %s0 = inlined_call_operand.hbm [shape: f32[2,32], index: 0, kind: input, shape index: {}]
  %s1 = inlined_call_operand.hbm [shape: f32[2,32], index: 1, kind: input, shape index: {}]
  %s2 = inlined_call_operand.vmem [shape: f32[1,2,2], index: 2, kind: output, shape index: {0}]
  %s3 = inlined_call_operand.vmem [shape: f32[1,2,2], index: 3, kind: output, shape index: {1}]
  %4 = xla_tuple %s2, %s3
  %s5 = sld [smem:[#allocation0]]
  $region42: #{pkt_loss.1} parent=0
    _
  %s7 = ssub.s32 1, %s5
  %s8 = scalar_select 0, %s7, %s5
  $region1: #{pkt_loss.1} parent=0
    #allocation2 [shape = 'u8[1024]{0}', space=vmem, size = 0x400, scoped, tag = 'input window, operand 0, single buffered']
    #allocation3 [shape = 's32[1]{0}', space=sflag, size = 0x4, scoped, tag = 'scoped memory for pkt_loss.1']
    #allocation4 [shape = 'u8[1024]{0}', space=vmem, size = 0x400, scoped, tag = 'input window, operand 1, single buffered']
    #allocation5 [shape = 's32[1]{0}', space=sflag, size = 0x4, scoped, tag = 'scoped memory for pkt_loss.1']
    %9 = vsyncpa [#allocation3], 0
    %10 = vsyncpa [#allocation5], 0
    // Predicated region
    $region2: #{pkt_loss.1} parent=1 // pred_check
      _
    $region3: #{pkt_loss.1} parent=1 // pred_check_branch
      %12 = sbr.rel (0) target = $region5
    $region4: #{pkt_loss.1} parent=1 // pred_region
      %s13 = sadd.s32 0, 0
      %p14 = scmp.lt.s32.totalorder %s13, 0
      %s15 = scalar_select %p14, %s13, 0
      %17 = vsyncadd [#allocation3], 0
      %s18 = smul.addr %s15, 2
      %s19 = scalar_lea.hbm %s0, %s18
      %s21 = sshll.u32 %s19, 4
      %s22 = int_to_ptr.hbm [resolvable:$true] %s21
      %s23 = sshll.u32 [#allocation2], 4
      %s24 = int_to_ptr.vmem [resolvable:$true] %s23
      %26 = dma.hbm_to_vmem [thread:$0]  %s22, 32, %s24, [#allocation3]
    $region5: #{pkt_loss.1} parent=1 // pred_fallthru
      _
    // Predicated region
    $region6: #{pkt_loss.1} parent=1 // pred_check
      _
    $region7: #{pkt_loss.1} parent=1 // pred_check_branch
      %28 = sbr.rel (0) target = $region9
    $region8: #{pkt_loss.1} parent=1 // pred_region
      %s29 = sadd.s32 0, 0
      %p30 = scmp.lt.s32.totalorder %s29, 0
      %s31 = scalar_select %p30, %s29, 0
      %33 = vsyncadd [#allocation5], 0
      %s34 = smul.addr %s31, 2
      %s35 = scalar_lea.hbm %s1, %s34
      %s37 = sshll.u32 %s35, 4
      %s38 = int_to_ptr.hbm [resolvable:$true] %s37
      %s39 = sshll.u32 [#allocation4], 4
      %s40 = int_to_ptr.vmem [resolvable:$true] %s39
      %42 = dma.hbm_to_vmem [thread:$0]  %s38, 32, %s40, [#allocation5]
    $region9: #{pkt_loss.1} parent=1 // pred_fallthru
      _
    // Predicated region
    $region10: #{pkt_loss.1} parent=1 // pred_check
      _
    $region11: #{pkt_loss.1} parent=1 // pred_check_branch
      %44 = sbr.rel (0) target = $region13
    $region12: #{pkt_loss.1} parent=1 // pred_region
      %46 = dma.done [#allocation3], 32
    $region13: #{pkt_loss.1} parent=1 // pred_fallthru
      _
    // Predicated region
    $region14: #{pkt_loss.1} parent=1 // pred_check
      _
    $region15: #{pkt_loss.1} parent=1 // pred_check_branch
      %48 = sbr.rel (0) target = $region17
    $region16: #{pkt_loss.1} parent=1 // pred_region
      %50 = dma.done [#allocation5], 32
    $region17: #{pkt_loss.1} parent=1 // pred_fallthru
      _
    %s51 = sadd.s32 0, 0
    %p52 = scmp.lt.s32.totalorder %s51, 0
    %s53 = scalar_select %p52, %s51, 0
    %s54 = sadd.s32 0, 0
    %p55 = scmp.lt.s32.totalorder %s54, 0
    %s56 = scalar_select %p55, %s54, 0
    %s57 = sadd.s32 0, 0
    %p58 = scmp.eq.s32.totalorder 0, 0
    // Predicated region
    $region18: #{pkt_loss.1} parent=1 // pred_check
      %p59 = pneg %p58
    $region19: #{pkt_loss.1} parent=1 // pred_check_branch
      %61 = sbr.rel (%p59) target = $region21
    $region20: #{pkt_loss.1} parent=1 // pred_region
      %vm62 = vcmask 9216
      %63 = vst.msk [vmem:[%s2] sm:$0x3] %vm62, 0.0
      %64 = vst.msk [vmem:[%s3] sm:$0x3] %vm62, 0.0
    $region21: #{pkt_loss.1} parent=1 // pred_fallthru
      _
    %p65 = scmp.lt.s32.totalorder %s57, 1
    // Predicated region
    $region22: #{pkt_loss.1} parent=1 // pred_check
      %p66 = pneg %p65
    $region23: #{pkt_loss.1} parent=1 // pred_check_branch
      %68 = sbr.rel (%p66) target = $region25
    $region24: #{pkt_loss.1} parent=1 // pred_region
      %v69 = vld [vmem:[#allocation2] sm:$0x3]
      %vm70 = vcmask 261120
      %v72 = vsel %vm70, %v69, 0
      %74 = vmatpush.xpose.msra.mxu0 0.0
      %75 = vmatpush.xpose.msra.mxu0 0.0
      %76 = vmatpush.xpose.msra.mxu0 0.0
      %77 = vmatpush.xpose.msra.mxu0 0.0
      %78 = vmatpush.xpose.msra.mxu0 0.0
      %79 = vmatpush.xpose.msra.mxu0 0.0
      %80 = vmatpush.xpose.msra.mxu0 0.0
      %81 = vmatpush.xpose.msra.mxu0 0.0
      %82 = vmatpush.xpose.msra.mxu0 0.0
      %83 = vmatpush.xpose.msra.mxu0 0.0
      %84 = vmatpush.xpose.msra.mxu0 0.0
      %85 = vmatpush.xpose.msra.mxu0 0.0
      %86 = vmatpush.xpose.msra.mxu0 0.0
      %87 = vmatpush.xpose.msra.mxu0 0.0
      %88 = vmatpush.xpose.msra.mxu0 0.0
      %89 = vmatpush.xpose.msra.mxu0 %v72
      %90 = vmatmul.f32.gmra.mxu0 %v72
      %v91 = vpop.f32.mrf.mxu0
      %v92 = vadd.f32 0.0, %v91
      %93 = vdwg.mxu0
      %v94 = vld [vmem:[%s2] sm:$0x3]
      %v95 = vadd.f32 %v94, %v92
      %vm96 = vcmask 9216
      %97 = vst.msk [vmem:[%s2] sm:$0x3] %vm96, %v95
      %v98 = vld [vmem:[#allocation4] sm:$0x3]
      %v100 = vsel %vm70, %v98, 0
      %102 = vmatpush.xpose.msra.mxu0 0.0
      %103 = vmatpush.xpose.msra.mxu0 0.0
      %104 = vmatpush.xpose.msra.mxu0 0.0
      %105 = vmatpush.xpose.msra.mxu0 0.0
      %106 = vmatpush.xpose.msra.mxu0 0.0
      %107 = vmatpush.xpose.msra.mxu0 0.0
      %108 = vmatpush.xpose.msra.mxu0 0.0
      %109 = vmatpush.xpose.msra.mxu0 0.0
      %110 = vmatpush.xpose.msra.mxu0 0.0
      %111 = vmatpush.xpose.msra.mxu0 0.0
      %112 = vmatpush.xpose.msra.mxu0 0.0
      %113 = vmatpush.xpose.msra.mxu0 0.0
      %114 = vmatpush.xpose.msra.mxu0 0.0
      %115 = vmatpush.xpose.msra.mxu0 0.0
      %116 = vmatpush.xpose.msra.mxu0 0.0
      %117 = vmatpush.xpose.msra.mxu0 %v100
      %118 = vmatmul.f32.gmra.mxu0 %v100
      %v119 = vpop.f32.mrf.mxu0
      %v120 = vadd.f32 0.0, %v119
      %121 = vdwg.mxu0
      %v122 = vld [vmem:[%s3] sm:$0x3]
      %v123 = vadd.f32 %v122, %v120
      %124 = vst.msk [vmem:[%s3] sm:$0x3] %vm96, %v123
    $region25: #{pkt_loss.1} parent=1 // pred_fallthru
      _
    // Predicated region
    $region26: #{pkt_loss.1} parent=1 // pred_check
      _
    $region27: #{pkt_loss.1} parent=1 // pred_check_branch
      %126 = sbr.rel (0) target = $region29
    $region28: #{pkt_loss.1} parent=1 // pred_region
      _
    $region29: #{pkt_loss.1} parent=1 // pred_fallthru
      _
    // Predicated region
    $region30: #{pkt_loss.1} parent=1 // pred_check
      _
    $region31: #{pkt_loss.1} parent=1 // pred_check_branch
      %128 = sbr.rel (0) target = $region33
    $region32: #{pkt_loss.1} parent=1 // pred_region
      _
    $region33: #{pkt_loss.1} parent=1 // pred_fallthru
      _
    // Predicated region
    $region34: #{pkt_loss.1} parent=1 // pred_check
      _
    $region35: #{pkt_loss.1} parent=1 // pred_check_branch
      %130 = sbr.rel (0) target = $region37
    $region36: #{pkt_loss.1} parent=1 // pred_region
      _
    $region37: #{pkt_loss.1} parent=1 // pred_fallthru
      _
    // Predicated region
    $region38: #{pkt_loss.1} parent=1 // pred_check
      _
    $region39: #{pkt_loss.1} parent=1 // pred_check_branch
      %132 = sbr.rel (0) target = $region41
    $region40: #{pkt_loss.1} parent=1 // pred_region
      _
    $region41: #{pkt_loss.1} parent=1 // pred_fallthru
      _
    %133 = vsyncpa [#allocation3], 1
    %134 = vsyncpa [#allocation5], 1

</llo_original>
